<compile_context>
chip_gen: v7x
topology: tpu7x:2x2x1
jax: 0.10.0
libtpu: 0.0.40
codegen_flags: <defaults>
</compile_context>

<pallas_src>
import functools

import jax
import jax.numpy as jnp
from jax.experimental import pallas as pl
from jax.experimental.pallas import tpu as pltpu

# ---------------------------------------------------------------- sizes (toy)
BATCH = 8      # batch size for the small self-test
DIM = 64       # feature dim (split into two halves of 32)
HALF = DIM // 2
HIDDEN = 32    # conditioner MLP hidden width
N_LAYERS = 4   # number of coupling layers


# ---------------------------------------------------------------- kernel
def _make_kernel(n_layers: int, half: int, compute_dtype):
    def discrete_flow_kernel(x_ref, w1_ref, b1_ref, wst_ref, bst_ref,
                             y_ref, nlogp_ref):
        x = x_ref[...]
        xl = x[:, :half]
        xr = x[:, half:]
        # Accumulate s elementwise; a single cross-lane reduction happens at the end
        # (replaces n_layers XLU reductions + (b,1) broadcast adds).
        s_acc = jnp.zeros((x.shape[0], half), jnp.float32)

        # Statically unrolled layer loop: parity is a Python bool, weights are
        # indexed with static ints, no selects and no per-layer state writeback.
        for l in range(n_layers):
            even = (l % 2) == 0
            cond = xl if even else xr

            # 2-layer MLP conditioner; s/t projections fused into one matmul.
            # Matmuls (and tanh, if compute_dtype=bf16) run in compute_dtype,
            # accumulation stays f32.
            a1 = (jnp.dot(cond.astype(compute_dtype),
                          w1_ref[l].astype(compute_dtype),
                          preferred_element_type=jnp.float32)
                  + b1_ref[l])
            h = jnp.tanh(a1.astype(compute_dtype))
            st = (jnp.dot(h, wst_ref[l].astype(compute_dtype),
                          preferred_element_type=jnp.float32)
                  + bst_ref[l])
            s = st[:, :half]          # f32
            t = st[:, half:]          # f32

            # Affine update of the other half, in f32.
            y = (xr if even else xl) * jnp.exp(s) + t
            if even:
                xr = y
            else:
                xl = y

            s_acc = s_acc + s

        # Store halves directly into the lane sub-ranges of the single (b_tile, DIM)
        # output (no concatenate temp); negate logp in-kernel, stored once.
        y_ref[:, :half] = xl.astype(y_ref.dtype)
        y_ref[:, half:] = xr.astype(y_ref.dtype)
        nlogp_ref[...] = -jnp.sum(s_acc, axis=-1, keepdims=True)

    return discrete_flow_kernel


# ---------------------------------------------------------------- tiling helper
def _largest_divisor_leq(n: int, cap: int) -> int:
    """Largest divisor of n that is <= cap (>= 1)."""
    cap = max(1, min(cap, n))
    for t in range(cap, 0, -1):
        if n % t == 0:
            return t
    return 1


# ---------------------------------------------------------------- wrapper
@functools.partial(jax.jit, static_argnames=("compute_dtype",))
def discrete_flow(x, params, compute_dtype=jnp.float32):
    """params = dict of stacked per-layer weights (leading axis = layer).

    Returns (concat([xL, xR], -1), -logp) exactly like DiscreteFlow.forward.
    Set compute_dtype=jnp.bfloat16 on v6e/v7x to run the conditioner MLP in bf16.
    """
    b, d = x.shape
    half = d // 2

    w1, b1 = params["w1"], params["b1"]
    # Fuse s/t projection weights: one (HIDDEN, 2*HALF) matmul per layer.
    wst = jnp.concatenate([params["ws"], params["wt"]], axis=-1)
    bst = jnp.concatenate([params["bs"], params["bt"]], axis=-1)
    n_layers = w1.shape[0]

    # Batch tiling:
    #  * small b: one tile (grid of 1) -> purely latency bound, nothing to shard.
    #  * b >= 512: tiles of up to 2048 rows (huge VMEM headroom even on v7x) and
    #    at least 2 grid steps so the "parallel" axis shards across both
    #    TensorCores on v7x; one extra step costs ~0.35 us on 1-TC chips.
    #  * b_tile is always an exact divisor of b (no padding / no rejects).
    if b >= 512:
        b_tile = _largest_divisor_leq(b, min(2048, b // 2))
    else:
        b_tile = b
    grid = (b // b_tile,)

    def full_weight_spec(arr):
        # Constant (all-zeros) index_map: Pallas keeps the block resident in VMEM
        # across grid steps instead of re-DMA'ing the (~60 KB total) weights.
        return pl.BlockSpec(arr.shape, lambda i: (0,) * arr.ndim)

    y, neg_logp = pl.pallas_call(
        _make_kernel(n_layers, half, compute_dtype),
        out_shape=(
            jax.ShapeDtypeStruct((b, d), x.dtype),
            jax.ShapeDtypeStruct((b, 1), jnp.float32),
        ),
        grid_spec=pltpu.PrefetchScalarGridSpec(
            num_scalar_prefetch=0,
            grid=grid,
            in_specs=[
                pl.BlockSpec((b_tile, d), lambda i: (i, 0)),  # x
                full_weight_spec(w1),                         # (L, HALF, HIDDEN)
                full_weight_spec(b1),                         # (L, 1, HIDDEN)
                full_weight_spec(wst),                        # (L, HIDDEN, 2*HALF)
                full_weight_spec(bst),                        # (L, 1, 2*HALF)
            ],
            out_specs=(
                pl.BlockSpec((b_tile, d), lambda i: (i, 0)),  # y (lane-dense)
                pl.BlockSpec((b_tile, 1), lambda i: (i, 0)),  # -logp (stored once)
            ),
        ),
        compiler_params=pltpu.CompilerParams(
            dimension_semantics=("parallel",),
        ),
    )(x, w1, b1, wst, bst)

    return y, neg_logp


# ---------------------------------------------------------------- reference
def discrete_flow_ref(x, params):
    half = x.shape[-1] // 2
    xl, xr = x[..., :half], x[..., half:]
    logp = jnp.zeros(x.shape[:-1] + (1,), jnp.float32)
    for l in range(params["w1"].shape[0]):
        w1, b1 = params["w1"][l], params["b1"][l, 0]
        ws, bs = params["ws"][l], params["bs"][l, 0]
        wt, bt = params["wt"][l], params["bt"][l, 0]
        cond = xl if l % 2 == 0 else xr
        h = jnp.tanh(cond @ w1 + b1)
        s = h @ ws + bs
        t = h @ wt + bt
        if l % 2 == 0:
            xr = xr * jnp.exp(s) + t
        else:
            xl = xl * jnp.exp(s) + t
        logp = logp + jnp.sum(s, axis=-1, keepdims=True)
    return jnp.concatenate([xl, xr], axis=-1), -logp


# ---------------------------------------------------------------- params
def make_params(key):
    ks = jax.random.split(key, 6)
    # Small scales so exp(s) stays tame.
    return {
        "w1": 0.3 * jax.random.normal(ks[0], (N_LAYERS, HALF, HIDDEN), jnp.float32),
        "b1": 0.1 * jax.random.normal(ks[1], (N_LAYERS, 1, HIDDEN), jnp.float32),
        "ws": 0.05 * jax.random.normal(ks[2], (N_LAYERS, HIDDEN, HALF), jnp.float32),
        "bs": 0.01 * jax.random.normal(ks[3], (N_LAYERS, 1, HALF), jnp.float32),
        "wt": 0.1 * jax.random.normal(ks[4], (N_LAYERS, HIDDEN, HALF), jnp.float32),
        "bt": 0.01 * jax.random.normal(ks[5], (N_LAYERS, 1, HALF), jnp.float32),
    }


if __name__ == "__main__":
    key = jax.random.PRNGKey(0)
    k_x, k_p, k_big = jax.random.split(key, 3)
    params = make_params(k_p)

    # Small-shape run (single batch tile, grid of 1).
    x = jax.random.normal(k_x, (BATCH, DIM), jnp.float32)
    y, neg_logp = discrete_flow(x, params)
    jax.block_until_ready((y, neg_logp))

    y_ref, neg_logp_ref = discrete_flow_ref(x, params)
    assert y.shape == (BATCH, DIM) and neg_logp.shape == (BATCH, 1)
    assert jnp.allclose(y, y_ref, atol=1e-5, rtol=1e-5)
    assert jnp.allclose(neg_logp, neg_logp_ref, atol=1e-5, rtol=1e-5)

    # Larger batch exercises the multi-step tiled grid (b_tile=512, grid=(2,))
    # and weight residency across steps.
    xb = jax.random.normal(k_big, (1024, DIM), jnp.float32)
    yb, neg_logp_b = discrete_flow(xb, params)
    jax.block_until_ready((yb, neg_logp_b))
    yb_ref, neg_logp_b_ref = discrete_flow_ref(xb, params)
    assert jnp.allclose(yb, yb_ref, atol=1e-5, rtol=1e-5)
    assert jnp.allclose(neg_logp_b, neg_logp_b_ref, atol=1e-5, rtol=1e-5)

    print("KERNEL_OK")
</pallas_src>

<mosaic_0001>
module attributes {stable_mosaic.version = 11 : i64} {
  func.func @discrete_flow_kernel(%arg0: i32, %arg1: memref<8x64xf32, #tpu.memory_space<vmem>>, %arg2: memref<4x32x32xf32, #tpu.memory_space<vmem>>, %arg3: memref<4x1x32xf32, #tpu.memory_space<vmem>>, %arg4: memref<4x32x64xf32, #tpu.memory_space<vmem>>, %arg5: memref<4x1x64xf32, #tpu.memory_space<vmem>>, %arg6: memref<8x64xf32, #tpu.memory_space<vmem>>, %arg7: memref<8x1xf32, #tpu.memory_space<vmem>>) attributes {dimension_semantics = [#tpu.dimension_semantics<parallel>], iteration_bounds = array<i64: 1>, scalar_prefetch = 0 : i64, scratch_operands = 0 : i64, tpu.core_type = #tpu.core_type<tc>, window_params = [{transform_indices = @transform_0, window_bounds = array<i64: 8, 64>}, {pipeline_mode = #tpu.pipeline_mode<synchronous>, transform_indices = @transform_1, window_bounds = array<i64: 4, 32, 32>}, {pipeline_mode = #tpu.pipeline_mode<synchronous>, transform_indices = @transform_2, window_bounds = array<i64: 4, 1, 32>}, {pipeline_mode = #tpu.pipeline_mode<synchronous>, transform_indices = @transform_3, window_bounds = array<i64: 4, 32, 64>}, {pipeline_mode = #tpu.pipeline_mode<synchronous>, transform_indices = @transform_4, window_bounds = array<i64: 4, 1, 64>}, {transform_indices = @transform_5, window_bounds = array<i64: 8, 64>}, {transform_indices = @transform_6, window_bounds = array<i64: 8, 1>}]} {
    %c0 = arith.constant 0 : index
    %c0_0 = arith.constant 0 : index
    %0 = vector.load %arg1[%c0, %c0_0] : memref<8x64xf32, #tpu.memory_space<vmem>>, vector<8x64xf32>
    %1 = vector.extract_strided_slice %0 {offsets = [0, 0], sizes = [8, 32], strides = [1, 1]} : vector<8x64xf32> to vector<8x32xf32>
    %2 = vector.extract_strided_slice %0 {offsets = [0, 32], sizes = [8, 32], strides = [1, 1]} : vector<8x64xf32> to vector<8x32xf32>
    %cst = arith.constant 0.000000e+00 : f32
    %3 = vector.broadcast %cst : f32 to vector<8x32xf32>
    %c0_1 = arith.constant 0 : index
    %c0_2 = arith.constant 0 : index
    %c0_3 = arith.constant 0 : index
    %4 = vector.load %arg2[%c0_1, %c0_2, %c0_3] : memref<4x32x32xf32, #tpu.memory_space<vmem>>, vector<1x32x32xf32>
    %5 = vector.shape_cast %4 : vector<1x32x32xf32> to vector<32x32xf32>
    %cst_4 = arith.constant dense<0.000000e+00> : vector<8x32xf32>
    %6 = tpu.matmul %1, %5, %cst_4 {dimension_numbers = #tpu.dot_dimension_numbers<[1], [0], [0], [1], [0, 0, 1, 1], [], []>} : vector<8x32xf32>, vector<32x32xf32>, vector<8x32xf32> -> vector<8x32xf32>
    %c0_5 = arith.constant 0 : index
    %c0_6 = arith.constant 0 : index
    %c0_7 = arith.constant 0 : index
    %7 = vector.load %arg3[%c0_5, %c0_6, %c0_7] : memref<4x1x32xf32, #tpu.memory_space<vmem>>, vector<1x1x32xf32>
    %8 = vector.shape_cast %7 : vector<1x1x32xf32> to vector<1x32xf32>
    %9 = vector.broadcast %8 : vector<1x32xf32> to vector<8x32xf32>
    %10 = arith.addf %6, %9 : vector<8x32xf32>
    %11 = math.tanh %10 : vector<8x32xf32>
    %c0_8 = arith.constant 0 : index
    %c0_9 = arith.constant 0 : index
    %c0_10 = arith.constant 0 : index
    %12 = vector.load %arg4[%c0_8, %c0_9, %c0_10] : memref<4x32x64xf32, #tpu.memory_space<vmem>>, vector<1x32x64xf32>
    %13 = vector.shape_cast %12 : vector<1x32x64xf32> to vector<32x64xf32>
    %cst_11 = arith.constant dense<0.000000e+00> : vector<8x64xf32>
    %14 = tpu.matmul %11, %13, %cst_11 {dimension_numbers = #tpu.dot_dimension_numbers<[1], [0], [0], [1], [0, 0, 1, 1], [], []>} : vector<8x32xf32>, vector<32x64xf32>, vector<8x64xf32> -> vector<8x64xf32>
    %c0_12 = arith.constant 0 : index
    %c0_13 = arith.constant 0 : index
    %c0_14 = arith.constant 0 : index
    %15 = vector.load %arg5[%c0_12, %c0_13, %c0_14] : memref<4x1x64xf32, #tpu.memory_space<vmem>>, vector<1x1x64xf32>
    %16 = vector.shape_cast %15 : vector<1x1x64xf32> to vector<1x64xf32>
    %17 = vector.broadcast %16 : vector<1x64xf32> to vector<8x64xf32>
    %18 = arith.addf %14, %17 : vector<8x64xf32>
    %19 = vector.extract_strided_slice %18 {offsets = [0, 0], sizes = [8, 32], strides = [1, 1]} : vector<8x64xf32> to vector<8x32xf32>
    %20 = vector.extract_strided_slice %18 {offsets = [0, 32], sizes = [8, 32], strides = [1, 1]} : vector<8x64xf32> to vector<8x32xf32>
    %21 = math.exp %19 : vector<8x32xf32>
    %22 = arith.mulf %2, %21 : vector<8x32xf32>
    %23 = arith.addf %22, %20 : vector<8x32xf32>
    %24 = arith.addf %3, %19 : vector<8x32xf32>
    %c1 = arith.constant 1 : index
    %c0_15 = arith.constant 0 : index
    %c0_16 = arith.constant 0 : index
    %25 = vector.load %arg2[%c1, %c0_15, %c0_16] : memref<4x32x32xf32, #tpu.memory_space<vmem>>, vector<1x32x32xf32>
    %26 = vector.shape_cast %25 : vector<1x32x32xf32> to vector<32x32xf32>
    %cst_17 = arith.constant dense<0.000000e+00> : vector<8x32xf32>
    %27 = tpu.matmul %23, %26, %cst_17 {dimension_numbers = #tpu.dot_dimension_numbers<[1], [0], [0], [1], [0, 0, 1, 1], [], []>} : vector<8x32xf32>, vector<32x32xf32>, vector<8x32xf32> -> vector<8x32xf32>
    %c1_18 = arith.constant 1 : index
    %c0_19 = arith.constant 0 : index
    %c0_20 = arith.constant 0 : index
    %28 = vector.load %arg3[%c1_18, %c0_19, %c0_20] : memref<4x1x32xf32, #tpu.memory_space<vmem>>, vector<1x1x32xf32>
    %29 = vector.shape_cast %28 : vector<1x1x32xf32> to vector<1x32xf32>
    %30 = vector.broadcast %29 : vector<1x32xf32> to vector<8x32xf32>
    %31 = arith.addf %27, %30 : vector<8x32xf32>
    %32 = math.tanh %31 : vector<8x32xf32>
    %c1_21 = arith.constant 1 : index
    %c0_22 = arith.constant 0 : index
    %c0_23 = arith.constant 0 : index
    %33 = vector.load %arg4[%c1_21, %c0_22, %c0_23] : memref<4x32x64xf32, #tpu.memory_space<vmem>>, vector<1x32x64xf32>
    %34 = vector.shape_cast %33 : vector<1x32x64xf32> to vector<32x64xf32>
    %cst_24 = arith.constant dense<0.000000e+00> : vector<8x64xf32>
    %35 = tpu.matmul %32, %34, %cst_24 {dimension_numbers = #tpu.dot_dimension_numbers<[1], [0], [0], [1], [0, 0, 1, 1], [], []>} : vector<8x32xf32>, vector<32x64xf32>, vector<8x64xf32> -> vector<8x64xf32>
    %c1_25 = arith.constant 1 : index
    %c0_26 = arith.constant 0 : index
    %c0_27 = arith.constant 0 : index
    %36 = vector.load %arg5[%c1_25, %c0_26, %c0_27] : memref<4x1x64xf32, #tpu.memory_space<vmem>>, vector<1x1x64xf32>
    %37 = vector.shape_cast %36 : vector<1x1x64xf32> to vector<1x64xf32>
    %38 = vector.broadcast %37 : vector<1x64xf32> to vector<8x64xf32>
    %39 = arith.addf %35, %38 : vector<8x64xf32>
    %40 = vector.extract_strided_slice %39 {offsets = [0, 0], sizes = [8, 32], strides = [1, 1]} : vector<8x64xf32> to vector<8x32xf32>
    %41 = vector.extract_strided_slice %39 {offsets = [0, 32], sizes = [8, 32], strides = [1, 1]} : vector<8x64xf32> to vector<8x32xf32>
    %42 = math.exp %40 : vector<8x32xf32>
    %43 = arith.mulf %1, %42 : vector<8x32xf32>
    %44 = arith.addf %43, %41 : vector<8x32xf32>
    %45 = arith.addf %24, %40 : vector<8x32xf32>
    %c2 = arith.constant 2 : index
    %c0_28 = arith.constant 0 : index
    %c0_29 = arith.constant 0 : index
    %46 = vector.load %arg2[%c2, %c0_28, %c0_29] : memref<4x32x32xf32, #tpu.memory_space<vmem>>, vector<1x32x32xf32>
    %47 = vector.shape_cast %46 : vector<1x32x32xf32> to vector<32x32xf32>
    %cst_30 = arith.constant dense<0.000000e+00> : vector<8x32xf32>
    %48 = tpu.matmul %44, %47, %cst_30 {dimension_numbers = #tpu.dot_dimension_numbers<[1], [0], [0], [1], [0, 0, 1, 1], [], []>} : vector<8x32xf32>, vector<32x32xf32>, vector<8x32xf32> -> vector<8x32xf32>
    %c2_31 = arith.constant 2 : index
    %c0_32 = arith.constant 0 : index
    %c0_33 = arith.constant 0 : index
    %49 = vector.load %arg3[%c2_31, %c0_32, %c0_33] : memref<4x1x32xf32, #tpu.memory_space<vmem>>, vector<1x1x32xf32>
    %50 = vector.shape_cast %49 : vector<1x1x32xf32> to vector<1x32xf32>
    %51 = vector.broadcast %50 : vector<1x32xf32> to vector<8x32xf32>
    %52 = arith.addf %48, %51 : vector<8x32xf32>
    %53 = math.tanh %52 : vector<8x32xf32>
    %c2_34 = arith.constant 2 : index
    %c0_35 = arith.constant 0 : index
    %c0_36 = arith.constant 0 : index
    %54 = vector.load %arg4[%c2_34, %c0_35, %c0_36] : memref<4x32x64xf32, #tpu.memory_space<vmem>>, vector<1x32x64xf32>
    %55 = vector.shape_cast %54 : vector<1x32x64xf32> to vector<32x64xf32>
    %cst_37 = arith.constant dense<0.000000e+00> : vector<8x64xf32>
    %56 = tpu.matmul %53, %55, %cst_37 {dimension_numbers = #tpu.dot_dimension_numbers<[1], [0], [0], [1], [0, 0, 1, 1], [], []>} : vector<8x32xf32>, vector<32x64xf32>, vector<8x64xf32> -> vector<8x64xf32>
    %c2_38 = arith.constant 2 : index
    %c0_39 = arith.constant 0 : index
    %c0_40 = arith.constant 0 : index
    %57 = vector.load %arg5[%c2_38, %c0_39, %c0_40] : memref<4x1x64xf32, #tpu.memory_space<vmem>>, vector<1x1x64xf32>
    %58 = vector.shape_cast %57 : vector<1x1x64xf32> to vector<1x64xf32>
    %59 = vector.broadcast %58 : vector<1x64xf32> to vector<8x64xf32>
    %60 = arith.addf %56, %59 : vector<8x64xf32>
    %61 = vector.extract_strided_slice %60 {offsets = [0, 0], sizes = [8, 32], strides = [1, 1]} : vector<8x64xf32> to vector<8x32xf32>
    %62 = vector.extract_strided_slice %60 {offsets = [0, 32], sizes = [8, 32], strides = [1, 1]} : vector<8x64xf32> to vector<8x32xf32>
    %63 = math.exp %61 : vector<8x32xf32>
    %64 = arith.mulf %23, %63 : vector<8x32xf32>
    %65 = arith.addf %64, %62 : vector<8x32xf32>
    %66 = arith.addf %45, %61 : vector<8x32xf32>
    %c3 = arith.constant 3 : index
    %c0_41 = arith.constant 0 : index
    %c0_42 = arith.constant 0 : index
    %67 = vector.load %arg2[%c3, %c0_41, %c0_42] : memref<4x32x32xf32, #tpu.memory_space<vmem>>, vector<1x32x32xf32>
    %68 = vector.shape_cast %67 : vector<1x32x32xf32> to vector<32x32xf32>
    %cst_43 = arith.constant dense<0.000000e+00> : vector<8x32xf32>
    %69 = tpu.matmul %65, %68, %cst_43 {dimension_numbers = #tpu.dot_dimension_numbers<[1], [0], [0], [1], [0, 0, 1, 1], [], []>} : vector<8x32xf32>, vector<32x32xf32>, vector<8x32xf32> -> vector<8x32xf32>
    %c3_44 = arith.constant 3 : index
    %c0_45 = arith.constant 0 : index
    %c0_46 = arith.constant 0 : index
    %70 = vector.load %arg3[%c3_44, %c0_45, %c0_46] : memref<4x1x32xf32, #tpu.memory_space<vmem>>, vector<1x1x32xf32>
    %71 = vector.shape_cast %70 : vector<1x1x32xf32> to vector<1x32xf32>
    %72 = vector.broadcast %71 : vector<1x32xf32> to vector<8x32xf32>
    %73 = arith.addf %69, %72 : vector<8x32xf32>
    %74 = math.tanh %73 : vector<8x32xf32>
    %c3_47 = arith.constant 3 : index
    %c0_48 = arith.constant 0 : index
    %c0_49 = arith.constant 0 : index
    %75 = vector.load %arg4[%c3_47, %c0_48, %c0_49] : memref<4x32x64xf32, #tpu.memory_space<vmem>>, vector<1x32x64xf32>
    %76 = vector.shape_cast %75 : vector<1x32x64xf32> to vector<32x64xf32>
    %cst_50 = arith.constant dense<0.000000e+00> : vector<8x64xf32>
    %77 = tpu.matmul %74, %76, %cst_50 {dimension_numbers = #tpu.dot_dimension_numbers<[1], [0], [0], [1], [0, 0, 1, 1], [], []>} : vector<8x32xf32>, vector<32x64xf32>, vector<8x64xf32> -> vector<8x64xf32>
    %c3_51 = arith.constant 3 : index
    %c0_52 = arith.constant 0 : index
    %c0_53 = arith.constant 0 : index
    %78 = vector.load %arg5[%c3_51, %c0_52, %c0_53] : memref<4x1x64xf32, #tpu.memory_space<vmem>>, vector<1x1x64xf32>
    %79 = vector.shape_cast %78 : vector<1x1x64xf32> to vector<1x64xf32>
    %80 = vector.broadcast %79 : vector<1x64xf32> to vector<8x64xf32>
    %81 = arith.addf %77, %80 : vector<8x64xf32>
    %82 = vector.extract_strided_slice %81 {offsets = [0, 0], sizes = [8, 32], strides = [1, 1]} : vector<8x64xf32> to vector<8x32xf32>
    %83 = vector.extract_strided_slice %81 {offsets = [0, 32], sizes = [8, 32], strides = [1, 1]} : vector<8x64xf32> to vector<8x32xf32>
    %84 = math.exp %82 : vector<8x32xf32>
    %85 = arith.mulf %44, %84 : vector<8x32xf32>
    %86 = arith.addf %85, %83 : vector<8x32xf32>
    %87 = arith.addf %66, %82 : vector<8x32xf32>
    %c0_54 = arith.constant 0 : index
    %c0_55 = arith.constant 0 : index
    %88 = vector.load %arg6[%c0_54, %c0_55] : memref<8x64xf32, #tpu.memory_space<vmem>>, vector<8x32xf32>
    tpu.vector_store %arg6[%c0_54, %c0_55], %86 {strides = array<i32>} : memref<8x64xf32, #tpu.memory_space<vmem>>, vector<8x32xf32>,
    %c0_56 = arith.constant 0 : index
    %c32 = arith.constant 32 : index
    %89 = vector.load %arg6[%c0_56, %c32] : memref<8x64xf32, #tpu.memory_space<vmem>>, vector<8x32xf32>
    tpu.vector_store %arg6[%c0_56, %c32], %65 {strides = array<i32>} : memref<8x64xf32, #tpu.memory_space<vmem>>, vector<8x32xf32>,
    %cst_57 = arith.constant dense<0.000000e+00> : vector<8xf32>
    %90 = vector.multi_reduction <add>, %87, %cst_57 [1] : vector<8x32xf32> to vector<8xf32>
    %91 = vector.shape_cast %90 : vector<8xf32> to vector<8x1xf32>
    %cst_58 = arith.constant 0.000000e+00 : f32
    %92 = vector.broadcast %cst_58 : f32 to vector<8x1xf32>
    %93 = arith.subf %92, %91 : vector<8x1xf32>
    %c0_59 = arith.constant 0 : index
    %c0_60 = arith.constant 0 : index
    %94 = vector.load %arg7[%c0_59, %c0_60] : memref<8x1xf32, #tpu.memory_space<vmem>>, vector<8x1xf32>
    tpu.vector_store %arg7[%c0_59, %c0_60], %93 {strides = array<i32>} : memref<8x1xf32, #tpu.memory_space<vmem>>, vector<8x1xf32>,
    return
  }
  func.func @transform_0(%arg0: i32) -> (i32, i32) {
    %c0_i32 = arith.constant 0 : i32
    %c0_i32_0 = arith.constant 0 : i32
    return %arg0, %c0_i32 : i32, i32
  }
  func.func @transform_1(%arg0: i32) -> (i32, i32, i32) {
    %c0_i32 = arith.constant 0 : i32
    %c0_i32_0 = arith.constant 0 : i32
    %c0_i32_1 = arith.constant 0 : i32
    %c0_i32_2 = arith.constant 0 : i32
    return %c0_i32, %c0_i32_0, %c0_i32_1 : i32, i32, i32
  }
  func.func @transform_2(%arg0: i32) -> (i32, i32, i32) {
    %c0_i32 = arith.constant 0 : i32
    %c0_i32_0 = arith.constant 0 : i32
    %c0_i32_1 = arith.constant 0 : i32
    %c0_i32_2 = arith.constant 0 : i32
    return %c0_i32, %c0_i32_0, %c0_i32_1 : i32, i32, i32
  }
  func.func @transform_3(%arg0: i32) -> (i32, i32, i32) {
    %c0_i32 = arith.constant 0 : i32
    %c0_i32_0 = arith.constant 0 : i32
    %c0_i32_1 = arith.constant 0 : i32
    %c0_i32_2 = arith.constant 0 : i32
    return %c0_i32, %c0_i32_0, %c0_i32_1 : i32, i32, i32
  }
  func.func @transform_4(%arg0: i32) -> (i32, i32, i32) {
    %c0_i32 = arith.constant 0 : i32
    %c0_i32_0 = arith.constant 0 : i32
    %c0_i32_1 = arith.constant 0 : i32
    %c0_i32_2 = arith.constant 0 : i32
    return %c0_i32, %c0_i32_0, %c0_i32_1 : i32, i32, i32
  }
  func.func @transform_5(%arg0: i32) -> (i32, i32) {
    %c0_i32 = arith.constant 0 : i32
    %c0_i32_0 = arith.constant 0 : i32
    return %arg0, %c0_i32 : i32, i32
  }
  func.func @transform_6(%arg0: i32) -> (i32, i32) {
    %c0_i32 = arith.constant 0 : i32
    %c0_i32_0 = arith.constant 0 : i32
    return %arg0, %c0_i32 : i32, i32
  }
}

</mosaic_0001>

<llo_original>
// kernel: discrete_flow.1
$region0: #{discrete_flow.1}
  #allocation0 [shape = 'u32[]', space=smem, size = 0x4, offset = 0x4, fixed_abs, tag = 'smem constant byte address 0x4 - core index']
  #allocation1 [shape = 'u32[144,128]{1,0:T(1,128)}', space=vmem, size = 0x12000, scoped, tag = 'internal scratch']
  %s0 = inlined_call_operand.vmem [shape: f32[8,64], index: 0, kind: input, shape index: {}]
  %s1 = inlined_call_operand.vmem [shape: f32[4,32,32], index: 1, kind: input, shape index: {}]
  %s2 = inlined_call_operand.vmem [shape: f32[4,1,32], index: 2, kind: input, shape index: {}]
  %s3 = inlined_call_operand.vmem [shape: f32[4,32,64], index: 3, kind: input, shape index: {}]
  %s4 = inlined_call_operand.vmem [shape: f32[4,1,64], index: 4, kind: input, shape index: {}]
  %s5 = inlined_call_operand.hbm [shape: f32[8,64], index: 5, kind: output, shape index: {0}]
  %s6 = inlined_call_operand.vmem [shape: f32[8,1], index: 6, kind: output, shape index: {1}]
  %7 = xla_tuple %s5, %s6
  %s8 = sld [smem:[#allocation0]]
  $region38: #{discrete_flow.1} parent=0
    _
  %s10 = ssub.s32 1, %s8
  %s11 = scalar_select 0, %s10, %s8
  $region1: #{discrete_flow.1} parent=0
    #allocation2 [shape = 'u8[4096]{0}', space=vmem, size = 0x1000, scoped, tag = 'output window, operand 0, single buffered']
    #allocation3 [shape = 's32[1]{0}', space=sflag, size = 0x4, scoped, tag = 'scoped memory for discrete_flow.1']
    %12 = vsyncpa [#allocation3], 0
    // Predicated region
    $region2: #{discrete_flow.1} parent=1 // pred_check
      _
    $region3: #{discrete_flow.1} parent=1 // pred_check_branch
      %14 = sbr.rel (0) target = $region5
    $region4: #{discrete_flow.1} parent=1 // pred_region
      _
    $region5: #{discrete_flow.1} parent=1 // pred_fallthru
      _
    // Predicated region
    $region6: #{discrete_flow.1} parent=1 // pred_check
      _
    $region7: #{discrete_flow.1} parent=1 // pred_check_branch
      %16 = sbr.rel (0) target = $region9
    $region8: #{discrete_flow.1} parent=1 // pred_region
      _
    $region9: #{discrete_flow.1} parent=1 // pred_fallthru
      _
    // Predicated region
    $region10: #{discrete_flow.1} parent=1 // pred_check
      _
    $region11: #{discrete_flow.1} parent=1 // pred_check_branch
      %18 = sbr.rel (0) target = $region13
    $region12: #{discrete_flow.1} parent=1 // pred_region
      _
    $region13: #{discrete_flow.1} parent=1 // pred_fallthru
      _
    // Predicated region
    $region14: #{discrete_flow.1} parent=1 // pred_check
      _
    $region15: #{discrete_flow.1} parent=1 // pred_check_branch
      %20 = sbr.rel (0) target = $region17
    $region16: #{discrete_flow.1} parent=1 // pred_region
      _
    $region17: #{discrete_flow.1} parent=1 // pred_fallthru
      _
    // Predicated region
    $region18: #{discrete_flow.1} parent=1 // pred_check
      _
    $region19: #{discrete_flow.1} parent=1 // pred_check_branch
      %22 = sbr.rel (0) target = $region21
    $region20: #{discrete_flow.1} parent=1 // pred_region
      _
    $region21: #{discrete_flow.1} parent=1 // pred_fallthru
      _
    %v23 = vld [vmem:[%s0] sm:$0xff]
    %v24 = vld [vmem:[%s1] sm:$0xff]
    %v25 = vld [vmem:[%s1 + $0x8] sm:$0xff]
    %v26 = vld [vmem:[%s1 + $0x10] sm:$0xff]
    %v27 = vld [vmem:[%s1 + $0x18] sm:$0xff]
    %v28 = vld [vmem:[%s2] sm:$0x1]
    %v30 = vlaneseq
    %v31 = vshrl.u32 %v30, 7
    %v32 = vsub.s32 0, %v31
    %v33 = vrot.slane %v28, %v32
    %vm35 = vcmask 261120
    %v37 = vsel %vm35, %v23, 0
    %39 = vmatprep.subr.mxu0 0.0
    %40 = vmatpush1.msra.mxu0 %v24
    %41 = vmatprep.subr.mxu0 0.0
    %42 = vmatpush1.msra.mxu0 %v25
    %43 = vmatprep.subr.mxu0 0.0
    %44 = vmatpush1.msra.mxu0 %v26
    %45 = vmatprep.subr.mxu0 0.0
    %46 = vmatpush1.msra.mxu0 %v27
    %47 = vmatprep.subr.mxu0 0.0
    %48 = vmatpush1.msra.mxu0 0.0
    %49 = vmatprep.subr.mxu0 0.0
    %50 = vmatpush1.msra.mxu0 0.0
    %51 = vmatprep.subr.mxu0 0.0
    %52 = vmatpush1.msra.mxu0 0.0
    %53 = vmatprep.subr.mxu0 0.0
    %54 = vmatpush1.msra.mxu0 0.0
    %55 = vmatprep.subr.mxu0 0.0
    %56 = vmatpush1.msra.mxu0 0.0
    %57 = vmatprep.subr.mxu0 0.0
    %58 = vmatpush1.msra.mxu0 0.0
    %59 = vmatprep.subr.mxu0 0.0
    %60 = vmatpush1.msra.mxu0 0.0
    %61 = vmatprep.subr.mxu0 0.0
    %62 = vmatpush1.msra.mxu0 0.0
    %63 = vmatprep.subr.mxu0 0.0
    %64 = vmatpush1.msra.mxu0 0.0
    %65 = vmatprep.subr.mxu0 0.0
    %66 = vmatpush1.msra.mxu0 0.0
    %67 = vmatprep.subr.mxu0 0.0
    %68 = vmatpush1.msra.mxu0 0.0
    %69 = vmatprep.subr.mxu0 0.0
    %70 = vmatpush1.msra.mxu0 0.0
    %71 = vmatprep.subr.mxu0 0.0
    %72 = vmatpush1.msra.mxu0 0.0
    %73 = vmatprep.subr.mxu0 0.0
    %74 = vmatpush1.msra.mxu0 0.0
    %75 = vmatprep.subr.mxu0 0.0
    %76 = vmatpush1.msra.mxu0 0.0
    %77 = vmatprep.subr.mxu0 0.0
    %78 = vmatpush1.msra.mxu0 0.0
    %79 = vmatprep.subr.mxu0 0.0
    %80 = vmatpush1.msra.mxu0 0.0
    %81 = vmatprep.subr.mxu0 0.0
    %82 = vmatpush1.msra.mxu0 0.0
    %83 = vmatprep.subr.mxu0 0.0
    %84 = vmatpush1.msra.mxu0 0.0
    %85 = vmatprep.subr.mxu0 0.0
    %86 = vmatpush1.msra.mxu0 0.0
    %87 = vmatprep.subr.mxu0 0.0
    %88 = vmatpush1.msra.mxu0 0.0
    %89 = vmatprep.subr.mxu0 0.0
    %90 = vmatpush1.msra.mxu0 0.0
    %91 = vmatprep.subr.mxu0 0.0
    %92 = vmatpush1.msra.mxu0 0.0
    %93 = vmatprep.subr.mxu0 0.0
    %94 = vmatpush1.msra.mxu0 0.0
    %95 = vmatprep.subr.mxu0 0.0
    %96 = vmatpush1.msra.mxu0 0.0
    %97 = vmatprep.subr.mxu0 0.0
    %98 = vmatpush1.msra.mxu0 0.0
    %99 = vmatprep.subr.mxu0 0.0
    %100 = vmatpush1.msra.mxu0 0.0
    %101 = vmatprep.subr.mxu0 0.0
    %102 = vmatpush1.msra.mxu0 0.0
    %103 = vmatprep.mubr.f32.mxu0 0.0
    %104 = vmatmul.mubr.f32.gmra.mrb[0].mxu0 %v37
    %v105 = vpop.f32.mrb[0].mxu0
    %v106 = vadd.f32 %v33, %v105
    %v107 = vpop.f32.mrb[0].mxu0
    %108 = vdwg.mxu0
    %v109 = vtanh.pop %v106
    %v110 = vld [vmem:[%s3] sm:$0xff]
    %v111 = vld [vmem:[%s3 + $0x8] sm:$0xff]
    %v112 = vld [vmem:[%s3 + $0x10] sm:$0xff]
    %v113 = vld [vmem:[%s3 + $0x18] sm:$0xff]
    %v114 = vld [vmem:[%s4] sm:$0x1]
    %v116 = vlaneseq
    %v117 = vshrl.u32 %v116, 7
    %v118 = vsub.s32 0, %v117
    %v119 = vrot.slane %v114, %v118
    %v122 = vsel %vm35, %v109, 0
    %124 = vmatprep.subr.mxu0 0.0
    %125 = vmatpush1.msra.mxu0 %v110
    %126 = vmatprep.subr.mxu0 0.0
    %127 = vmatpush1.msra.mxu0 %v111
    %128 = vmatprep.subr.mxu0 0.0
    %129 = vmatpush1.msra.mxu0 %v112
    %130 = vmatprep.subr.mxu0 0.0
    %131 = vmatpush1.msra.mxu0 %v113
    %132 = vmatprep.subr.mxu0 0.0
    %133 = vmatpush1.msra.mxu0 0.0
    %134 = vmatprep.subr.mxu0 0.0
    %135 = vmatpush1.msra.mxu0 0.0
    %136 = vmatprep.subr.mxu0 0.0
    %137 = vmatpush1.msra.mxu0 0.0
    %138 = vmatprep.subr.mxu0 0.0
    %139 = vmatpush1.msra.mxu0 0.0
    %140 = vmatprep.subr.mxu0 0.0
    %141 = vmatpush1.msra.mxu0 0.0
    %142 = vmatprep.subr.mxu0 0.0
    %143 = vmatpush1.msra.mxu0 0.0
    %144 = vmatprep.subr.mxu0 0.0
    %145 = vmatpush1.msra.mxu0 0.0
    %146 = vmatprep.subr.mxu0 0.0
    %147 = vmatpush1.msra.mxu0 0.0
    %148 = vmatprep.subr.mxu0 0.0
    %149 = vmatpush1.msra.mxu0 0.0
    %150 = vmatprep.subr.mxu0 0.0
    %151 = vmatpush1.msra.mxu0 0.0
    %152 = vmatprep.subr.mxu0 0.0
    %153 = vmatpush1.msra.mxu0 0.0
    %154 = vmatprep.subr.mxu0 0.0
    %155 = vmatpush1.msra.mxu0 0.0
    %156 = vmatprep.subr.mxu0 0.0
    %157 = vmatpush1.msra.mxu0 0.0
    %158 = vmatprep.subr.mxu0 0.0
    %159 = vmatpush1.msra.mxu0 0.0
    %160 = vmatprep.subr.mxu0 0.0
    %161 = vmatpush1.msra.mxu0 0.0
    %162 = vmatprep.subr.mxu0 0.0
    %163 = vmatpush1.msra.mxu0 0.0
    %164 = vmatprep.subr.mxu0 0.0
    %165 = vmatpush1.msra.mxu0 0.0
    %166 = vmatprep.subr.mxu0 0.0
    %167 = vmatpush1.msra.mxu0 0.0
    %168 = vmatprep.subr.mxu0 0.0
    %169 = vmatpush1.msra.mxu0 0.0
    %170 = vmatprep.subr.mxu0 0.0
    %171 = vmatpush1.msra.mxu0 0.0
    %172 = vmatprep.subr.mxu0 0.0
    %173 = vmatpush1.msra.mxu0 0.0
    %174 = vmatprep.subr.mxu0 0.0
    %175 = vmatpush1.msra.mxu0 0.0
    %176 = vmatprep.subr.mxu0 0.0
    %177 = vmatpush1.msra.mxu0 0.0
    %178 = vmatprep.subr.mxu0 0.0
    %179 = vmatpush1.msra.mxu0 0.0
    %180 = vmatprep.subr.mxu0 0.0
    %181 = vmatpush1.msra.mxu0 0.0
    %182 = vmatprep.subr.mxu0 0.0
    %183 = vmatpush1.msra.mxu0 0.0
    %184 = vmatprep.subr.mxu0 0.0
    %185 = vmatpush1.msra.mxu0 0.0
    %186 = vmatprep.subr.mxu0 0.0
    %187 = vmatpush1.msra.mxu0 0.0
    %188 = vmatprep.mubr.f32.mxu0 0.0
    %189 = vmatmul.mubr.f32.gmra.mrb[0].mxu0 %v122
    %v190 = vpop.f32.mrb[0].mxu0
    %v191 = vadd.f32 %v119, %v190
    %v192 = vpop.f32.mrb[0].mxu0
    %193 = vdwg.mxu0
    %v194 = vmul.f32 %v191, 1.442695
    %v195 = vpow.pop %v194
    %197 = vrot.lane.b32.xlu0 %v195, 32
    %v198 = vpop.permute.xlu0 %197
    %v200 = vmul.f32 %v23, %v198
    %v201 = vadd.f32 %v200, %v191
    %v202 = vadd.f32 %v191, 0.0
    %s203 = scalar_lea.vmem %s1, 32
    %v204 = vld [vmem:[%s203] sm:$0xff]
    %v205 = vld [vmem:[%s203 + $0x8] sm:$0xff]
    %v206 = vld [vmem:[%s203 + $0x10] sm:$0xff]
    %v207 = vld [vmem:[%s203 + $0x18] sm:$0xff]
    %s208 = scalar_lea.vmem %s2, 1
    %v209 = vld [vmem:[%s208] sm:$0x1]
    %v211 = vlaneseq
    %v212 = vshrl.u32 %v211, 7
    %v213 = vsub.s32 0, %v212
    %v214 = vrot.slane %v209, %v213
    %217 = vrot.lane.b32.xlu0 %v201, 96
    %v218 = vpop.permute.xlu0 %217
    %v219 = vsel %vm35, %v218, 0
    %221 = vmatprep.subr.mxu0 0.0
    %222 = vmatpush1.msra.mxu0 %v204
    %223 = vmatprep.subr.mxu0 0.0
    %224 = vmatpush1.msra.mxu0 %v205
    %225 = vmatprep.subr.mxu0 0.0
    %226 = vmatpush1.msra.mxu0 %v206
    %227 = vmatprep.subr.mxu0 0.0
    %228 = vmatpush1.msra.mxu0 %v207
    %229 = vmatprep.subr.mxu0 0.0
    %230 = vmatpush1.msra.mxu0 0.0
    %231 = vmatprep.subr.mxu0 0.0
    %232 = vmatpush1.msra.mxu0 0.0
    %233 = vmatprep.subr.mxu0 0.0
    %234 = vmatpush1.msra.mxu0 0.0
    %235 = vmatprep.subr.mxu0 0.0
    %236 = vmatpush1.msra.mxu0 0.0
    %237 = vmatprep.subr.mxu0 0.0
    %238 = vmatpush1.msra.mxu0 0.0
    %239 = vmatprep.subr.mxu0 0.0
    %240 = vmatpush1.msra.mxu0 0.0
    %241 = vmatprep.subr.mxu0 0.0
    %242 = vmatpush1.msra.mxu0 0.0
    %243 = vmatprep.subr.mxu0 0.0
    %244 = vmatpush1.msra.mxu0 0.0
    %245 = vmatprep.subr.mxu0 0.0
    %246 = vmatpush1.msra.mxu0 0.0
    %247 = vmatprep.subr.mxu0 0.0
    %248 = vmatpush1.msra.mxu0 0.0
    %249 = vmatprep.subr.mxu0 0.0
    %250 = vmatpush1.msra.mxu0 0.0
    %251 = vmatprep.subr.mxu0 0.0
    %252 = vmatpush1.msra.mxu0 0.0
    %253 = vmatprep.subr.mxu0 0.0
    %254 = vmatpush1.msra.mxu0 0.0
    %255 = vmatprep.subr.mxu0 0.0
    %256 = vmatpush1.msra.mxu0 0.0
    %257 = vmatprep.subr.mxu0 0.0
    %258 = vmatpush1.msra.mxu0 0.0
    %259 = vmatprep.subr.mxu0 0.0
    %260 = vmatpush1.msra.mxu0 0.0
    %261 = vmatprep.subr.mxu0 0.0
    %262 = vmatpush1.msra.mxu0 0.0
    %263 = vmatprep.subr.mxu0 0.0
    %264 = vmatpush1.msra.mxu0 0.0
    %265 = vmatprep.subr.mxu0 0.0
    %266 = vmatpush1.msra.mxu0 0.0
    %267 = vmatprep.subr.mxu0 0.0
    %268 = vmatpush1.msra.mxu0 0.0
    %269 = vmatprep.subr.mxu0 0.0
    %270 = vmatpush1.msra.mxu0 0.0
    %271 = vmatprep.subr.mxu0 0.0
    %272 = vmatpush1.msra.mxu0 0.0
    %273 = vmatprep.subr.mxu0 0.0
    %274 = vmatpush1.msra.mxu0 0.0
    %275 = vmatprep.subr.mxu0 0.0
    %276 = vmatpush1.msra.mxu0 0.0
    %277 = vmatprep.subr.mxu0 0.0
    %278 = vmatpush1.msra.mxu0 0.0
    %279 = vmatprep.subr.mxu0 0.0
    %280 = vmatpush1.msra.mxu0 0.0
    %281 = vmatprep.subr.mxu0 0.0
    %282 = vmatpush1.msra.mxu0 0.0
    %283 = vmatprep.subr.mxu0 0.0
    %284 = vmatpush1.msra.mxu0 0.0
    %285 = vmatprep.mubr.f32.mxu0 0.0
    %286 = vmatmul.mubr.f32.gmra.mrb[0].mxu0 %v219
    %v287 = vpop.f32.mrb[0].mxu0
    %v288 = vadd.f32 %v214, %v287
    %v289 = vpop.f32.mrb[0].mxu0
    %290 = vdwg.mxu0
    %v291 = vtanh.pop %v288
    %s292 = scalar_lea.vmem %s3, 32
    %v293 = vld [vmem:[%s292] sm:$0xff]
    %v294 = vld [vmem:[%s292 + $0x8] sm:$0xff]
    %v295 = vld [vmem:[%s292 + $0x10] sm:$0xff]
    %v296 = vld [vmem:[%s292 + $0x18] sm:$0xff]
    %s297 = scalar_lea.vmem %s4, 1
    %v298 = vld [vmem:[%s297] sm:$0x1]
    %v300 = vlaneseq
    %v301 = vshrl.u32 %v300, 7
    %v302 = vsub.s32 0, %v301
    %v303 = vrot.slane %v298, %v302
    %v306 = vsel %vm35, %v291, 0
    %308 = vmatprep.subr.mxu0 0.0
    %309 = vmatpush1.msra.mxu0 %v293
    %310 = vmatprep.subr.mxu0 0.0
    %311 = vmatpush1.msra.mxu0 %v294
    %312 = vmatprep.subr.mxu0 0.0
    %313 = vmatpush1.msra.mxu0 %v295
    %314 = vmatprep.subr.mxu0 0.0
    %315 = vmatpush1.msra.mxu0 %v296
    %316 = vmatprep.subr.mxu0 0.0
    %317 = vmatpush1.msra.mxu0 0.0
    %318 = vmatprep.subr.mxu0 0.0
    %319 = vmatpush1.msra.mxu0 0.0
    %320 = vmatprep.subr.mxu0 0.0
    %321 = vmatpush1.msra.mxu0 0.0
    %322 = vmatprep.subr.mxu0 0.0
    %323 = vmatpush1.msra.mxu0 0.0
    %324 = vmatprep.subr.mxu0 0.0
    %325 = vmatpush1.msra.mxu0 0.0
    %326 = vmatprep.subr.mxu0 0.0
    %327 = vmatpush1.msra.mxu0 0.0
    %328 = vmatprep.subr.mxu0 0.0
    %329 = vmatpush1.msra.mxu0 0.0
    %330 = vmatprep.subr.mxu0 0.0
    %331 = vmatpush1.msra.mxu0 0.0
    %332 = vmatprep.subr.mxu0 0.0
    %333 = vmatpush1.msra.mxu0 0.0
    %334 = vmatprep.subr.mxu0 0.0
    %335 = vmatpush1.msra.mxu0 0.0
    %336 = vmatprep.subr.mxu0 0.0
    %337 = vmatpush1.msra.mxu0 0.0
    %338 = vmatprep.subr.mxu0 0.0
    %339 = vmatpush1.msra.mxu0 0.0
    %340 = vmatprep.subr.mxu0 0.0
    %341 = vmatpush1.msra.mxu0 0.0
    %342 = vmatprep.subr.mxu0 0.0
    %343 = vmatpush1.msra.mxu0 0.0
    %344 = vmatprep.subr.mxu0 0.0
    %345 = vmatpush1.msra.mxu0 0.0
    %346 = vmatprep.subr.mxu0 0.0
    %347 = vmatpush1.msra.mxu0 0.0
    %348 = vmatprep.subr.mxu0 0.0
    %349 = vmatpush1.msra.mxu0 0.0
    %350 = vmatprep.subr.mxu0 0.0
    %351 = vmatpush1.msra.mxu0 0.0
    %352 = vmatprep.subr.mxu0 0.0
    %353 = vmatpush1.msra.mxu0 0.0
    %354 = vmatprep.subr.mxu0 0.0
    %355 = vmatpush1.msra.mxu0 0.0
    %356 = vmatprep.subr.mxu0 0.0
    %357 = vmatpush1.msra.mxu0 0.0
    %358 = vmatprep.subr.mxu0 0.0
    %359 = vmatpush1.msra.mxu0 0.0
    %360 = vmatprep.subr.mxu0 0.0
    %361 = vmatpush1.msra.mxu0 0.0
    %362 = vmatprep.subr.mxu0 0.0
    %363 = vmatpush1.msra.mxu0 0.0
    %364 = vmatprep.subr.mxu0 0.0
    %365 = vmatpush1.msra.mxu0 0.0
    %366 = vmatprep.subr.mxu0 0.0
    %367 = vmatpush1.msra.mxu0 0.0
    %368 = vmatprep.subr.mxu0 0.0
    %369 = vmatpush1.msra.mxu0 0.0
    %370 = vmatprep.subr.mxu0 0.0
    %371 = vmatpush1.msra.mxu0 0.0
    %372 = vmatprep.mubr.f32.mxu0 0.0
    %373 = vmatmul.mubr.f32.gmra.mrb[0].mxu0 %v306
    %v374 = vpop.f32.mrb[0].mxu0
    %v375 = vadd.f32 %v303, %v374
    %v376 = vpop.f32.mrb[0].mxu0
    %377 = vdwg.mxu0
    %v378 = vmul.f32 %v375, 1.442695
    %v379 = vpow.pop %v378
    %v380 = vmul.f32 %v23, %v379
    %382 = vrot.lane.b32.xlu0 %v375, 96
    %v383 = vpop.permute.xlu0 %382
    %v385 = vadd.f32 %v380, %v383
    %v386 = vadd.f32 %v202, %v375
    %s387 = scalar_lea.vmem %s1, 64
    %v388 = vld [vmem:[%s387] sm:$0xff]
    %v389 = vld [vmem:[%s387 + $0x8] sm:$0xff]
    %v390 = vld [vmem:[%s387 + $0x10] sm:$0xff]
    %v391 = vld [vmem:[%s387 + $0x18] sm:$0xff]
    %s392 = scalar_lea.vmem %s2, 2
    %v393 = vld [vmem:[%s392] sm:$0x1]
    %v395 = vlaneseq
    %v396 = vshrl.u32 %v395, 7
    %v397 = vsub.s32 0, %v396
    %v398 = vrot.slane %v393, %v397
    %v401 = vsel %vm35, %v385, 0
    %403 = vmatprep.subr.mxu0 0.0
    %404 = vmatpush1.msra.mxu0 %v388
    %405 = vmatprep.subr.mxu0 0.0
    %406 = vmatpush1.msra.mxu0 %v389
    %407 = vmatprep.subr.mxu0 0.0
    %408 = vmatpush1.msra.mxu0 %v390
    %409 = vmatprep.subr.mxu0 0.0
    %410 = vmatpush1.msra.mxu0 %v391
    %411 = vmatprep.subr.mxu0 0.0
    %412 = vmatpush1.msra.mxu0 0.0
    %413 = vmatprep.subr.mxu0 0.0
    %414 = vmatpush1.msra.mxu0 0.0
    %415 = vmatprep.subr.mxu0 0.0
    %416 = vmatpush1.msra.mxu0 0.0
    %417 = vmatprep.subr.mxu0 0.0
    %418 = vmatpush1.msra.mxu0 0.0
    %419 = vmatprep.subr.mxu0 0.0
    %420 = vmatpush1.msra.mxu0 0.0
    %421 = vmatprep.subr.mxu0 0.0
    %422 = vmatpush1.msra.mxu0 0.0
    %423 = vmatprep.subr.mxu0 0.0
    %424 = vmatpush1.msra.mxu0 0.0
    %425 = vmatprep.subr.mxu0 0.0
    %426 = vmatpush1.msra.mxu0 0.0
    %427 = vmatprep.subr.mxu0 0.0
    %428 = vmatpush1.msra.mxu0 0.0
    %429 = vmatprep.subr.mxu0 0.0
    %430 = vmatpush1.msra.mxu0 0.0
    %431 = vmatprep.subr.mxu0 0.0
    %432 = vmatpush1.msra.mxu0 0.0
    %433 = vmatprep.subr.mxu0 0.0
    %434 = vmatpush1.msra.mxu0 0.0
    %435 = vmatprep.subr.mxu0 0.0
    %436 = vmatpush1.msra.mxu0 0.0
    %437 = vmatprep.subr.mxu0 0.0
    %438 = vmatpush1.msra.mxu0 0.0
    %439 = vmatprep.subr.mxu0 0.0
    %440 = vmatpush1.msra.mxu0 0.0
    %441 = vmatprep.subr.mxu0 0.0
    %442 = vmatpush1.msra.mxu0 0.0
    %443 = vmatprep.subr.mxu0 0.0
    %444 = vmatpush1.msra.mxu0 0.0
    %445 = vmatprep.subr.mxu0 0.0
    %446 = vmatpush1.msra.mxu0 0.0
    %447 = vmatprep.subr.mxu0 0.0
    %448 = vmatpush1.msra.mxu0 0.0
    %449 = vmatprep.subr.mxu0 0.0
    %450 = vmatpush1.msra.mxu0 0.0
    %451 = vmatprep.subr.mxu0 0.0
    %452 = vmatpush1.msra.mxu0 0.0
    %453 = vmatprep.subr.mxu0 0.0
    %454 = vmatpush1.msra.mxu0 0.0
    %455 = vmatprep.subr.mxu0 0.0
    %456 = vmatpush1.msra.mxu0 0.0
    %457 = vmatprep.subr.mxu0 0.0
    %458 = vmatpush1.msra.mxu0 0.0
    %459 = vmatprep.subr.mxu0 0.0
    %460 = vmatpush1.msra.mxu0 0.0
    %461 = vmatprep.subr.mxu0 0.0
    %462 = vmatpush1.msra.mxu0 0.0
    %463 = vmatprep.subr.mxu0 0.0
    %464 = vmatpush1.msra.mxu0 0.0
    %465 = vmatprep.subr.mxu0 0.0
    %466 = vmatpush1.msra.mxu0 0.0
    %467 = vmatprep.mubr.f32.mxu0 0.0
    %468 = vmatmul.mubr.f32.gmra.mrb[0].mxu0 %v401
    %v469 = vpop.f32.mrb[0].mxu0
    %v470 = vadd.f32 %v398, %v469
    %v471 = vpop.f32.mrb[0].mxu0
    %472 = vdwg.mxu0
    %v473 = vtanh.pop %v470
    %s474 = scalar_lea.vmem %s3, 64
    %v475 = vld [vmem:[%s474] sm:$0xff]
    %v476 = vld [vmem:[%s474 + $0x8] sm:$0xff]
    %v477 = vld [vmem:[%s474 + $0x10] sm:$0xff]
    %v478 = vld [vmem:[%s474 + $0x18] sm:$0xff]
    %s479 = scalar_lea.vmem %s4, 2
    %v480 = vld [vmem:[%s479] sm:$0x1]
    %v482 = vlaneseq
    %v483 = vshrl.u32 %v482, 7
    %v484 = vsub.s32 0, %v483
    %v485 = vrot.slane %v480, %v484
    %v488 = vsel %vm35, %v473, 0
    %490 = vmatprep.subr.mxu0 0.0
    %491 = vmatpush1.msra.mxu0 %v475
    %492 = vmatprep.subr.mxu0 0.0
    %493 = vmatpush1.msra.mxu0 %v476
    %494 = vmatprep.subr.mxu0 0.0
    %495 = vmatpush1.msra.mxu0 %v477
    %496 = vmatprep.subr.mxu0 0.0
    %497 = vmatpush1.msra.mxu0 %v478
    %498 = vmatprep.subr.mxu0 0.0
    %499 = vmatpush1.msra.mxu0 0.0
    %500 = vmatprep.subr.mxu0 0.0
    %501 = vmatpush1.msra.mxu0 0.0
    %502 = vmatprep.subr.mxu0 0.0
    %503 = vmatpush1.msra.mxu0 0.0
    %504 = vmatprep.subr.mxu0 0.0
    %505 = vmatpush1.msra.mxu0 0.0
    %506 = vmatprep.subr.mxu0 0.0
    %507 = vmatpush1.msra.mxu0 0.0
    %508 = vmatprep.subr.mxu0 0.0
    %509 = vmatpush1.msra.mxu0 0.0
    %510 = vmatprep.subr.mxu0 0.0
    %511 = vmatpush1.msra.mxu0 0.0
    %512 = vmatprep.subr.mxu0 0.0
    %513 = vmatpush1.msra.mxu0 0.0
    %514 = vmatprep.subr.mxu0 0.0
    %515 = vmatpush1.msra.mxu0 0.0
    %516 = vmatprep.subr.mxu0 0.0
    %517 = vmatpush1.msra.mxu0 0.0
    %518 = vmatprep.subr.mxu0 0.0
    %519 = vmatpush1.msra.mxu0 0.0
    %520 = vmatprep.subr.mxu0 0.0
    %521 = vmatpush1.msra.mxu0 0.0
    %522 = vmatprep.subr.mxu0 0.0
    %523 = vmatpush1.msra.mxu0 0.0
    %524 = vmatprep.subr.mxu0 0.0
    %525 = vmatpush1.msra.mxu0 0.0
    %526 = vmatprep.subr.mxu0 0.0
    %527 = vmatpush1.msra.mxu0 0.0
    %528 = vmatprep.subr.mxu0 0.0
    %529 = vmatpush1.msra.mxu0 0.0
    %530 = vmatprep.subr.mxu0 0.0
    %531 = vmatpush1.msra.mxu0 0.0
    %532 = vmatprep.subr.mxu0 0.0
    %533 = vmatpush1.msra.mxu0 0.0
    %534 = vmatprep.subr.mxu0 0.0
    %535 = vmatpush1.msra.mxu0 0.0
    %536 = vmatprep.subr.mxu0 0.0
    %537 = vmatpush1.msra.mxu0 0.0
    %538 = vmatprep.subr.mxu0 0.0
    %539 = vmatpush1.msra.mxu0 0.0
    %540 = vmatprep.subr.mxu0 0.0
    %541 = vmatpush1.msra.mxu0 0.0
    %542 = vmatprep.subr.mxu0 0.0
    %543 = vmatpush1.msra.mxu0 0.0
    %544 = vmatprep.subr.mxu0 0.0
    %545 = vmatpush1.msra.mxu0 0.0
    %546 = vmatprep.subr.mxu0 0.0
    %547 = vmatpush1.msra.mxu0 0.0
    %548 = vmatprep.subr.mxu0 0.0
    %549 = vmatpush1.msra.mxu0 0.0
    %550 = vmatprep.subr.mxu0 0.0
    %551 = vmatpush1.msra.mxu0 0.0
    %552 = vmatprep.subr.mxu0 0.0
    %553 = vmatpush1.msra.mxu0 0.0
    %554 = vmatprep.mubr.f32.mxu0 0.0
    %555 = vmatmul.mubr.f32.gmra.mrb[0].mxu0 %v488
    %v556 = vpop.f32.mrb[0].mxu0
    %v557 = vadd.f32 %v485, %v556
    %v558 = vpop.f32.mrb[0].mxu0
    %559 = vdwg.mxu0
    %v560 = vmul.f32 %v557, 1.442695
    %v561 = vpow.pop %v560
    %563 = vrot.lane.b32.xlu0 %v561, 32
    %v564 = vpop.permute.xlu0 %563
    %v566 = vmul.f32 %v201, %v564
    %v567 = vadd.f32 %v566, %v557
    %v568 = vadd.f32 %v386, %v557
    %s569 = scalar_lea.vmem %s1, 96
    %v570 = vld [vmem:[%s569] sm:$0xff]
    %v571 = vld [vmem:[%s569 + $0x8] sm:$0xff]
    %v572 = vld [vmem:[%s569 + $0x10] sm:$0xff]
    %v573 = vld [vmem:[%s569 + $0x18] sm:$0xff]
    %s574 = scalar_lea.vmem %s2, 3
    %v575 = vld [vmem:[%s574] sm:$0x1]
    %v577 = vlaneseq
    %v578 = vshrl.u32 %v577, 7
    %v579 = vsub.s32 0, %v578
    %v580 = vrot.slane %v575, %v579
    %583 = vrot.lane.b32.xlu0 %v567, 96
    %v584 = vpop.permute.xlu0 %583
    %v585 = vsel %vm35, %v584, 0
    %587 = vmatprep.subr.mxu0 0.0
    %588 = vmatpush1.msra.mxu0 %v570
    %589 = vmatprep.subr.mxu0 0.0
    %590 = vmatpush1.msra.mxu0 %v571
    %591 = vmatprep.subr.mxu0 0.0
    %592 = vmatpush1.msra.mxu0 %v572
    %593 = vmatprep.subr.mxu0 0.0
    %594 = vmatpush1.msra.mxu0 %v573
    %595 = vmatprep.subr.mxu0 0.0
    %596 = vmatpush1.msra.mxu0 0.0
    %597 = vmatprep.subr.mxu0 0.0
    %598 = vmatpush1.msra.mxu0 0.0
    %599 = vmatprep.subr.mxu0 0.0
    %600 = vmatpush1.msra.mxu0 0.0
    %601 = vmatprep.subr.mxu0 0.0
    %602 = vmatpush1.msra.mxu0 0.0
    %603 = vmatprep.subr.mxu0 0.0
    %604 = vmatpush1.msra.mxu0 0.0
    %605 = vmatprep.subr.mxu0 0.0
    %606 = vmatpush1.msra.mxu0 0.0
    %607 = vmatprep.subr.mxu0 0.0
    %608 = vmatpush1.msra.mxu0 0.0
    %609 = vmatprep.subr.mxu0 0.0
    %610 = vmatpush1.msra.mxu0 0.0
    %611 = vmatprep.subr.mxu0 0.0
    %612 = vmatpush1.msra.mxu0 0.0
    %613 = vmatprep.subr.mxu0 0.0
    %614 = vmatpush1.msra.mxu0 0.0
    %615 = vmatprep.subr.mxu0 0.0
    %616 = vmatpush1.msra.mxu0 0.0
    %617 = vmatprep.subr.mxu0 0.0
    %618 = vmatpush1.msra.mxu0 0.0
    %619 = vmatprep.subr.mxu0 0.0
    %620 = vmatpush1.msra.mxu0 0.0
    %621 = vmatprep.subr.mxu0 0.0
    %622 = vmatpush1.msra.mxu0 0.0
    %623 = vmatprep.subr.mxu0 0.0
    %624 = vmatpush1.msra.mxu0 0.0
    %625 = vmatprep.subr.mxu0 0.0
    %626 = vmatpush1.msra.mxu0 0.0
    %627 = vmatprep.subr.mxu0 0.0
    %628 = vmatpush1.msra.mxu0 0.0
    %629 = vmatprep.subr.mxu0 0.0
    %630 = vmatpush1.msra.mxu0 0.0
    %631 = vmatprep.subr.mxu0 0.0
    %632 = vmatpush1.msra.mxu0 0.0
    %633 = vmatprep.subr.mxu0 0.0
    %634 = vmatpush1.msra.mxu0 0.0
    %635 = vmatprep.subr.mxu0 0.0
    %636 = vmatpush1.msra.mxu0 0.0
    %637 = vmatprep.subr.mxu0 0.0
    %638 = vmatpush1.msra.mxu0 0.0
    %639 = vmatprep.subr.mxu0 0.0
    %640 = vmatpush1.msra.mxu0 0.0
    %641 = vmatprep.subr.mxu0 0.0
    %642 = vmatpush1.msra.mxu0 0.0
    %643 = vmatprep.subr.mxu0 0.0
    %644 = vmatpush1.msra.mxu0 0.0
    %645 = vmatprep.subr.mxu0 0.0
    %646 = vmatpush1.msra.mxu0 0.0
    %647 = vmatprep.subr.mxu0 0.0
    %648 = vmatpush1.msra.mxu0 0.0
    %649 = vmatprep.subr.mxu0 0.0
    %650 = vmatpush1.msra.mxu0 0.0
    %651 = vmatprep.mubr.f32.mxu0 0.0
    %652 = vmatmul.mubr.f32.gmra.mrb[0].mxu0 %v585
    %v653 = vpop.f32.mrb[0].mxu0
    %v654 = vadd.f32 %v580, %v653
    %v655 = vpop.f32.mrb[0].mxu0
    %656 = vdwg.mxu0
    %v657 = vtanh.pop %v654
    %s658 = scalar_lea.vmem %s3, 96
    %v659 = vld [vmem:[%s658] sm:$0xff]
    %v660 = vld [vmem:[%s658 + $0x8] sm:$0xff]
    %v661 = vld [vmem:[%s658 + $0x10] sm:$0xff]
    %v662 = vld [vmem:[%s658 + $0x18] sm:$0xff]
    %s663 = scalar_lea.vmem %s4, 3
    %v664 = vld [vmem:[%s663] sm:$0x1]
    %v666 = vlaneseq
    %v667 = vshrl.u32 %v666, 7
    %v668 = vsub.s32 0, %v667
    %v669 = vrot.slane %v664, %v668
    %v672 = vsel %vm35, %v657, 0
    %674 = vmatprep.subr.mxu0 0.0
    %675 = vmatpush1.msra.mxu0 %v659
    %676 = vmatprep.subr.mxu0 0.0
    %677 = vmatpush1.msra.mxu0 %v660
    %678 = vmatprep.subr.mxu0 0.0
    %679 = vmatpush1.msra.mxu0 %v661
    %680 = vmatprep.subr.mxu0 0.0
    %681 = vmatpush1.msra.mxu0 %v662
    %682 = vmatprep.subr.mxu0 0.0
    %683 = vmatpush1.msra.mxu0 0.0
    %684 = vmatprep.subr.mxu0 0.0
    %685 = vmatpush1.msra.mxu0 0.0
    %686 = vmatprep.subr.mxu0 0.0
    %687 = vmatpush1.msra.mxu0 0.0
    %688 = vmatprep.subr.mxu0 0.0
    %689 = vmatpush1.msra.mxu0 0.0
    %690 = vmatprep.subr.mxu0 0.0
    %691 = vmatpush1.msra.mxu0 0.0
    %692 = vmatprep.subr.mxu0 0.0
    %693 = vmatpush1.msra.mxu0 0.0
    %694 = vmatprep.subr.mxu0 0.0
    %695 = vmatpush1.msra.mxu0 0.0
    %696 = vmatprep.subr.mxu0 0.0
    %697 = vmatpush1.msra.mxu0 0.0
    %698 = vmatprep.subr.mxu0 0.0
    %699 = vmatpush1.msra.mxu0 0.0
    %700 = vmatprep.subr.mxu0 0.0
    %701 = vmatpush1.msra.mxu0 0.0
    %702 = vmatprep.subr.mxu0 0.0
    %703 = vmatpush1.msra.mxu0 0.0
    %704 = vmatprep.subr.mxu0 0.0
    %705 = vmatpush1.msra.mxu0 0.0
    %706 = vmatprep.subr.mxu0 0.0
    %707 = vmatpush1.msra.mxu0 0.0
    %708 = vmatprep.subr.mxu0 0.0
    %709 = vmatpush1.msra.mxu0 0.0
    %710 = vmatprep.subr.mxu0 0.0
    %711 = vmatpush1.msra.mxu0 0.0
    %712 = vmatprep.subr.mxu0 0.0
    %713 = vmatpush1.msra.mxu0 0.0
    %714 = vmatprep.subr.mxu0 0.0
    %715 = vmatpush1.msra.mxu0 0.0
    %716 = vmatprep.subr.mxu0 0.0
    %717 = vmatpush1.msra.mxu0 0.0
    %718 = vmatprep.subr.mxu0 0.0
    %719 = vmatpush1.msra.mxu0 0.0
    %720 = vmatprep.subr.mxu0 0.0
    %721 = vmatpush1.msra.mxu0 0.0
    %722 = vmatprep.subr.mxu0 0.0
    %723 = vmatpush1.msra.mxu0 0.0
    %724 = vmatprep.subr.mxu0 0.0
    %725 = vmatpush1.msra.mxu0 0.0
    %726 = vmatprep.subr.mxu0 0.0
    %727 = vmatpush1.msra.mxu0 0.0
    %728 = vmatprep.subr.mxu0 0.0
    %729 = vmatpush1.msra.mxu0 0.0
    %730 = vmatprep.subr.mxu0 0.0
    %731 = vmatpush1.msra.mxu0 0.0
    %732 = vmatprep.subr.mxu0 0.0
    %733 = vmatpush1.msra.mxu0 0.0
    %734 = vmatprep.subr.mxu0 0.0
    %735 = vmatpush1.msra.mxu0 0.0
    %736 = vmatprep.subr.mxu0 0.0
    %737 = vmatpush1.msra.mxu0 0.0
    %738 = vmatprep.mubr.f32.mxu0 0.0
    %739 = vmatmul.mubr.f32.gmra.mrb[0].mxu0 %v672
    %v740 = vpop.f32.mrb[0].mxu0
    %v741 = vadd.f32 %v669, %v740
    %v742 = vpop.f32.mrb[0].mxu0
    %743 = vdwg.mxu0
    %v744 = vmul.f32 %v741, 1.442695
    %v745 = vpow.pop %v744
    %v746 = vmul.f32 %v385, %v745
    %748 = vrot.lane.b32.xlu0 %v741, 96
    %v749 = vpop.permute.xlu0 %748
    %v751 = vadd.f32 %v746, %v749
    %v752 = vadd.f32 %v568, %v741
    %753 = vst.msk [vmem:[#allocation2] sm:$0xff] %vm35, %v751
    %vm754 = vcmask 523520
    %755 = vst.msk [vmem:[#allocation2] sm:$0xff] %vm754, %v567
    %v756 = vsel %vm35, %v752, 0.0
    %757 = vadd.xlane.f32.xlu0 %v756
    %v758 = vpop.xlane.xlu0 %757
    %v759 = vsub.f32 0.0, %v758
    %vm760 = vcmask 7168
    %761 = vst.msk [vmem:[%s6] sm:$0xff] %vm760, %v759
    // Predicated region
    $region22: #{discrete_flow.1} parent=1 // pred_check
      _
    $region23: #{discrete_flow.1} parent=1 // pred_check_branch
      %763 = sbr.rel (0) target = $region25
    $region24: #{discrete_flow.1} parent=1 // pred_region
      %s765 = ssub.s32 128, 128
      %766 = vsyncadd [#allocation3], %s765
      %s768 = sshll.u32 [#allocation2], 4
      %s769 = int_to_ptr.vmem [resolvable:$true] %s768
      %771 = dma.vmem_to_hbm [thread:$0]  %s769, 128, %s5, [#allocation3]
    $region25: #{discrete_flow.1} parent=1 // pred_fallthru
      _
    // Predicated region
    $region26: #{discrete_flow.1} parent=1 // pred_check
      _
    $region27: #{discrete_flow.1} parent=1 // pred_check_branch
      %773 = sbr.rel (0) target = $region29
    $region28: #{discrete_flow.1} parent=1 // pred_region
      _
    $region29: #{discrete_flow.1} parent=1 // pred_fallthru
      _
    // Predicated region
    $region30: #{discrete_flow.1} parent=1 // pred_check
      _
    $region31: #{discrete_flow.1} parent=1 // pred_check_branch
      %775 = sbr.rel (0) target = $region33
    $region32: #{discrete_flow.1} parent=1 // pred_region
      %776 = dma.done [#allocation3], 128
    $region33: #{discrete_flow.1} parent=1 // pred_fallthru
      _
    // Predicated region
    $region34: #{discrete_flow.1} parent=1 // pred_check
      _
    $region35: #{discrete_flow.1} parent=1 // pred_check_branch
      %778 = sbr.rel (0) target = $region37
    $region36: #{discrete_flow.1} parent=1 // pred_region
      _
    $region37: #{discrete_flow.1} parent=1 // pred_fallthru
      _
    %779 = vsyncpa [#allocation3], 1

</llo_original>
